<compile_context>
chip_gen: v7x
topology: tpu7x:2x2x1
jax: 0.10.0
libtpu: 0.0.40
codegen_flags: <defaults>
</compile_context>

<pallas_src>
import functools

import jax
import jax.numpy as jnp
from jax.experimental import pallas as pl
from jax.experimental.pallas import tpu as pltpu


# ----------------------------------------------------------------------------
# Tiling helper
# ----------------------------------------------------------------------------
def _pick_tile(dim, target, align):
    """Largest multiple of `align` that divides `dim` and is <= target, else full dim."""
    best = None
    t = align
    limit = min(dim, target)
    while t <= limit:
        if dim % t == 0:
            best = t
        t += align
    return best if best is not None else dim


# ----------------------------------------------------------------------------
# Kernel bodies
# ----------------------------------------------------------------------------
def _linear_kernel(x_ref, w_ref, b_ref, o_ref, acc_ref, *, activation):
    # x: [tm, tk], w: [tn, tk] (torch [out, in] layout), b: [1, tn], acc: [tm, tn] f32
    @pl.when(pl.program_id(2) == 0)
    def _init():
        acc_ref[...] = jnp.zeros_like(acc_ref)

    acc_ref[...] += jax.lax.dot_general(
        x_ref[...], w_ref[...], (((1,), (1,)), ((), ())),
        preferred_element_type=jnp.float32)

    @pl.when(pl.program_id(2) == pl.num_programs(2) - 1)
    def _finalize():
        r = acc_ref[...] + b_ref[...]
        if activation == "relu":
            r = jnp.maximum(r, 0.0)
        o_ref[...] = r.astype(o_ref.dtype)


def _linear_res_ln_kernel(x_ref, w_ref, b_ref, res_ref, g_ref, beta_ref, o_ref,
                          acc_ref, *, eps):
    # Fused: (x @ w^T + b) + res, then LayerNorm over the (full) feature axis.
    @pl.when(pl.program_id(1) == 0)
    def _init():
        acc_ref[...] = jnp.zeros_like(acc_ref)

    acc_ref[...] += jax.lax.dot_general(
        x_ref[...], w_ref[...], (((1,), (1,)), ((), ())),
        preferred_element_type=jnp.float32)

    @pl.when(pl.program_id(1) == pl.num_programs(1) - 1)
    def _finalize():
        y = acc_ref[...] + b_ref[...] + res_ref[...].astype(jnp.float32)
        mu = jnp.mean(y, axis=-1, keepdims=True)
        yc = y - mu
        var = jnp.mean(yc * yc, axis=-1, keepdims=True)
        inv = jax.lax.rsqrt(var + eps)
        o_ref[...] = ((yc * inv) * g_ref[...] + beta_ref[...]).astype(o_ref.dtype)


def _ln_kernel(x_ref, g_ref, b_ref, o_ref, *, eps):
    y = x_ref[...].astype(jnp.float32)
    mu = jnp.mean(y, axis=-1, keepdims=True)
    yc = y - mu
    var = jnp.mean(yc * yc, axis=-1, keepdims=True)
    o_ref[...] = ((yc * jax.lax.rsqrt(var + eps)) * g_ref[...]
                  + b_ref[...]).astype(o_ref.dtype)


def _rel_shift_exact(x):
    """Exact Transformer-XL _rel_shift on a [Q, K] register tile (K >= Q).

    out[i, j] = x[i, c] if c < K else (0 if c == K else x[i+1, c-K-1]),  c = j + Q-1-i.
    Implemented with iota + log2(Q) constant lane-rolls + selects (no gather)."""
    q, k = x.shape
    if q == 1:
        return x
    x_next = jnp.concatenate([x[1:, :], x[:1, :]], axis=0)            # row i -> x[i+1]
    z = jnp.concatenate([x, jnp.zeros((q, 1), x.dtype), x_next], axis=1)  # [Q, 2K+1]
    row = jax.lax.broadcasted_iota(jnp.int32, (q, 1), 0)
    shift = (q - 1) - row                                              # left-rotate per row
    b = 1
    while b < q:
        rolled = jnp.concatenate([z[:, b:], z[:, :b]], axis=1)
        z = jnp.where((shift & b) != 0, rolled, z)
        b *= 2
    return z[:, :k]


def _rel_attention_kernel(q_ref, kv_ref, remb_ref, rbias_ref, rwb_ref, mask_ref,
                          o_ref, *, scale, n_head, d_head, dot_dtype):
    # q: [1, Q, H*D], kv: [1, K, 2*H*D], remb: [H, K, D], rbias: [H, 1, K],
    # rwb: [H, 1, D], mask: [1, Q, K], o: [1, Q, H*D]
    hd = n_head * d_head
    mask = mask_ref[0]                                                 # [Q, K]
    for h in range(n_head):
        sl = slice(h * d_head, (h + 1) * d_head)
        q = q_ref[0, :, sl].astype(jnp.float32)                        # [Q, D]
        k = kv_ref[0, :, sl]                                           # [K, D]
        v = kv_ref[0, :, hd + h * d_head: hd + (h + 1) * d_head]       # [K, D]

        rw_q = (q + rwb_ref[h]).astype(dot_dtype)
        ac = jax.lax.dot_general(rw_q, k.astype(dot_dtype),
                                 (((1,), (1,)), ((), ())),
                                 preferred_element_type=jnp.float32)   # [Q, K]
        x = jax.lax.dot_general(q.astype(dot_dtype), remb_ref[h].astype(dot_dtype),
                                (((1,), (1,)), ((), ())),
                                preferred_element_type=jnp.float32)    # [Q, K]
        bd = _rel_shift_exact(x + rbias_ref[h])                        # exact rel-shift

        score = (ac + bd) * scale
        # -1e30 instead of -inf: identical post-softmax, avoids NaN on fully-masked rows.
        score = jnp.where(mask != 0.0, jnp.float32(-1e30), score)
        m = jnp.max(score, axis=-1, keepdims=True)
        e = jnp.exp(score - m)
        denom = jnp.sum(e, axis=-1, keepdims=True)
        pv = jax.lax.dot_general(e.astype(dot_dtype), v.astype(dot_dtype),
                                 (((1,), (0,)), ((), ())),
                                 preferred_element_type=jnp.float32)   # [Q, D]
        o_ref[0, :, sl] = (pv * (1.0 / denom)).astype(o_ref.dtype)     # deferred norm


# ----------------------------------------------------------------------------
# Pallas wrappers
# ----------------------------------------------------------------------------
def pallas_linear(x, w_nk, b=None, activation=None, *, compute_dtype=jnp.float32,
                  out_dtype=None, tm_t=256, tn_t=256, tk_t=512):
    """y = act(x @ w_nk^T + b); x: [M, K], w_nk: [N, K] (torch [out,in] layout)."""
    M, K = x.shape
    N = w_nk.shape[0]
    if out_dtype is None:
        out_dtype = compute_dtype
    xc = x.astype(compute_dtype)
    wc = w_nk.astype(compute_dtype)
    bb = (jnp.zeros((N,), jnp.float32) if b is None
          else b.astype(jnp.float32)).reshape(1, N)

    tm = _pick_tile(M, tm_t, 8)
    tn = _pick_tile(N, tn_t, 128)
    tk = _pick_tile(K, tk_t, 128)

    kernel = functools.partial(_linear_kernel, activation=activation)
    return pl.pallas_call(
        kernel,
        out_shape=jax.ShapeDtypeStruct((M, N), out_dtype),
        grid=(M // tm, N // tn, K // tk),
        in_specs=[
            pl.BlockSpec((tm, tk), lambda i, j, k: (i, k)),
            pl.BlockSpec((tn, tk), lambda i, j, k: (j, k)),
            pl.BlockSpec((1, tn), lambda i, j, k: (0, j)),
        ],
        out_specs=pl.BlockSpec((tm, tn), lambda i, j, k: (i, j)),
        scratch_shapes=[pltpu.VMEM((tm, tn), jnp.float32)],
        compiler_params=pltpu.CompilerParams(
            dimension_semantics=("parallel", "parallel", "arbitrary")),
    )(xc, wc, bb)


def pallas_linear_res_ln(x, w_nk, b, res, gamma, beta, *, compute_dtype=jnp.float32,
                         out_dtype=jnp.float32, eps=1e-5, tm_t=256, tk_t=512):
    """LayerNorm((x @ w_nk^T + b) + res) fused in the matmul finalize (N untiled)."""
    M, K = x.shape
    N = w_nk.shape[0]
    xc = x.astype(compute_dtype)
    wc = w_nk.astype(compute_dtype)
    bb = (jnp.zeros((N,), jnp.float32) if b is None
          else b.astype(jnp.float32)).reshape(1, N)
    g2 = gamma.astype(jnp.float32).reshape(1, N)
    be2 = beta.astype(jnp.float32).reshape(1, N)

    tm = _pick_tile(M, tm_t, 8)
    tk = _pick_tile(K, tk_t, 128)

    kernel = functools.partial(_linear_res_ln_kernel, eps=eps)
    return pl.pallas_call(
        kernel,
        out_shape=jax.ShapeDtypeStruct((M, N), out_dtype),
        grid=(M // tm, K // tk),
        in_specs=[
            pl.BlockSpec((tm, tk), lambda i, k: (i, k)),
            pl.BlockSpec((N, tk), lambda i, k: (0, k)),
            pl.BlockSpec((1, N), lambda i, k: (0, 0)),
            pl.BlockSpec((tm, N), lambda i, k: (i, 0)),
            pl.BlockSpec((1, N), lambda i, k: (0, 0)),
            pl.BlockSpec((1, N), lambda i, k: (0, 0)),
        ],
        out_specs=pl.BlockSpec((tm, N), lambda i, k: (i, 0)),
        scratch_shapes=[pltpu.VMEM((tm, N), jnp.float32)],
        compiler_params=pltpu.CompilerParams(
            dimension_semantics=("parallel", "arbitrary")),
    )(xc, wc, bb, res, g2, be2)


def pallas_layernorm(x, gamma, beta, *, eps=1e-5, out_dtype=jnp.float32, tm_t=256):
    """LayerNorm(x) over the feature axis; x: [M, D]."""
    M, D = x.shape
    tm = _pick_tile(M, tm_t, 8)
    g2 = gamma.astype(jnp.float32).reshape(1, D)
    b2 = beta.astype(jnp.float32).reshape(1, D)
    return pl.pallas_call(
        functools.partial(_ln_kernel, eps=eps),
        out_shape=jax.ShapeDtypeStruct((M, D), out_dtype),
        grid=(M // tm,),
        in_specs=[
            pl.BlockSpec((tm, D), lambda i: (i, 0)),
            pl.BlockSpec((1, D), lambda i: (0, 0)),
            pl.BlockSpec((1, D), lambda i: (0, 0)),
        ],
        out_specs=pl.BlockSpec((tm, D), lambda i: (i, 0)),
        compiler_params=pltpu.CompilerParams(dimension_semantics=("parallel",)),
    )(x, g2, b2)


def pallas_rel_attention(q_heads, kv_heads, r_emb_h, r_bias_h, r_w_bias_h, mask,
                         scale, n_head, d_head, *, compute_dtype, out_dtype):
    """Fused relative-position attention.  Output: [B, Q, n_head*d_head] (lane-dense)."""
    B, Q, HD = q_heads.shape
    K = kv_heads.shape[1]

    if mask.shape[0] == B:
        mask_map = lambda b: (b, 0, 0)
    else:
        mask_map = lambda b: (0, 0, 0)

    kernel = functools.partial(_rel_attention_kernel, scale=scale, n_head=n_head,
                               d_head=d_head, dot_dtype=compute_dtype)
    return pl.pallas_call(
        kernel,
        out_shape=jax.ShapeDtypeStruct((B, Q, HD), out_dtype),
        grid=(B,),
        in_specs=[
            pl.BlockSpec((1, Q, HD), lambda b: (b, 0, 0)),
            pl.BlockSpec((1, K, 2 * HD), lambda b: (b, 0, 0)),
            pl.BlockSpec((n_head, K, d_head), lambda b: (0, 0, 0)),
            pl.BlockSpec((n_head, 1, K), lambda b: (0, 0, 0)),
            pl.BlockSpec((n_head, 1, d_head), lambda b: (0, 0, 0)),
            pl.BlockSpec((1, Q, K), mask_map),
        ],
        out_specs=pl.BlockSpec((1, Q, HD), lambda b: (b, 0, 0)),
        compiler_params=pltpu.CompilerParams(dimension_semantics=("parallel",)),
    )(q_heads, kv_heads, r_emb_h, r_bias_h, r_w_bias_h, mask)


# ----------------------------------------------------------------------------
# Layer forward (wrapper = layout glue + kernel orchestration)
# ----------------------------------------------------------------------------
def rel_learnable_decoder_layer(params, w, r_emb, r_w_bias, r_bias,
                                attn_mask=None, mems=None, pre_lnorm=False,
                                compute_dtype=jnp.float32):
    """Forward of RelLearnableDecoderLayer (eval mode: dropout = identity)."""
    qlen, bsz, d_model = w.shape
    n_head, d_head = r_w_bias.shape
    HD = n_head * d_head
    scale = 1.0 / (d_head ** 0.5)
    cd = compute_dtype

    # Batch-major internal layout (lane-dense attention I/O, no per-head transposes).
    w_t = jnp.transpose(w, (1, 0, 2)).astype(jnp.float32)              # [B, qlen, d]
    if mems is not None and mems.size > 0:
        mems_t = jnp.transpose(mems, (1, 0, 2)).astype(jnp.float32)
        cat_t = jnp.concatenate([mems_t, w_t], axis=1)                 # [B, klen, d]
    else:
        cat_t = w_t
    klen = cat_t.shape[1]

    if pre_lnorm:
        attn_inp = pallas_layernorm(cat_t.reshape(bsz * klen, d_model),
                                    params["ln1_g"], params["ln1_b"],
                                    out_dtype=jnp.float32).reshape(bsz, klen, d_model)
    else:
        attn_inp = cat_t

    # Split QKV so Q is only projected for the last qlen rows.
    qkv_w = params["qkv_w"]                   # [3*HD, d_model], torch [out, in]
    q_w, kv_w = qkv_w[:HD], qkv_w[HD:]
    q_in = attn_inp[:, -qlen:, :].reshape(bsz * qlen, d_model)
    kv_in = attn_inp.reshape(bsz * klen, d_model)

    q_heads = pallas_linear(q_in, q_w, compute_dtype=cd, out_dtype=cd
                            ).reshape(bsz, qlen, HD)
    kv_heads = pallas_linear(kv_in, kv_w, compute_dtype=cd, out_dtype=cd
                             ).reshape(bsz, klen, 2 * HD)

    # r_emb / r_bias pad-or-slice to klen (tiny parameter-side layout glue).
    r_len = r_emb.shape[0]
    if klen > r_len:
        r_emb_k = jnp.concatenate(
            [jnp.broadcast_to(r_emb[0:1], (klen - r_len, n_head, d_head)), r_emb], 0)
        r_bias_k = jnp.concatenate(
            [jnp.broadcast_to(r_bias[0:1], (klen - r_len, n_head)), r_bias], 0)
    else:
        r_emb_k = r_emb[-klen:]
        r_bias_k = r_bias[-klen:]

    r_emb_h = jnp.transpose(r_emb_k, (1, 0, 2)).astype(jnp.float32)          # [H, K, D]
    r_bias_h = jnp.transpose(r_bias_k, (1, 0))[:, None, :].astype(jnp.float32)  # [H,1,K]
    r_w_bias_h = r_w_bias[:, None, :].astype(jnp.float32)                    # [H, 1, D]

    # Mask -> [1 or B, qlen, klen] float32 (nonzero = masked out).
    if attn_mask is None:
        mask = jnp.zeros((1, qlen, klen), jnp.float32)
    else:
        am = jnp.asarray(attn_mask)
        if am.ndim == 2:
            mask = (am != 0).astype(jnp.float32)[None]
        elif am.ndim == 3:
            mask = (jnp.transpose(am, (2, 0, 1)) != 0).astype(jnp.float32)
        else:
            raise ValueError("attn_mask must be 2-D or 3-D")

    attn_vec = pallas_rel_attention(q_heads, kv_heads, r_emb_h, r_bias_h,
                                    r_w_bias_h, mask, scale, n_head, d_head,
                                    compute_dtype=cd, out_dtype=cd)          # [B, Q, HD]
    attn_vec2d = attn_vec.reshape(bsz * qlen, HD)
    res2d = w_t.reshape(bsz * qlen, d_model)

    if pre_lnorm:
        attn_out = pallas_linear(attn_vec2d, params["o_w"], compute_dtype=cd,
                                 out_dtype=jnp.float32)
        # TODO(synk): pre-lnorm residual adds are plain element-wise adds left to XLA.
        out1 = res2d + attn_out
        ff_in = pallas_layernorm(out1, params["ln2_g"], params["ln2_b"], out_dtype=cd)
    else:
        out1 = pallas_linear_res_ln(attn_vec2d, params["o_w"], None, res2d,
                                    params["ln1_g"], params["ln1_b"],
                                    compute_dtype=cd, out_dtype=cd)
        ff_in = out1

    h1 = pallas_linear(ff_in, params["ff1_w"], params["ff1_b"], activation="relu",
                       compute_dtype=cd, out_dtype=cd)
    if pre_lnorm:
        core = pallas_linear(h1, params["ff2_w"], params["ff2_b"], compute_dtype=cd,
                             out_dtype=jnp.float32)
        out2d = out1 + core
    else:
        out2d = pallas_linear_res_ln(h1, params["ff2_w"], params["ff2_b"], out1,
                                     params["ln2_g"], params["ln2_b"],
                                     compute_dtype=cd, out_dtype=jnp.float32)

    return jnp.transpose(out2d.reshape(bsz, qlen, d_model), (1, 0, 2))


# ----------------------------------------------------------------------------
# Pure-JAX reference (mirrors the PyTorch module, eval mode)
# ----------------------------------------------------------------------------
def reference_forward(params, w, r_emb, r_w_bias, r_bias,
                      attn_mask=None, mems=None, pre_lnorm=False):
    hp = jax.lax.Precision.HIGHEST
    qlen, bsz, d_model = w.shape
    n_head, d_head = r_w_bias.shape
    scale = 1.0 / (d_head ** 0.5)

    def layer_norm(x, g, b, eps=1e-5):
        mu = x.mean(-1, keepdims=True)
        var = ((x - mu) ** 2).mean(-1, keepdims=True)
        return (x - mu) / jnp.sqrt(var + eps) * g + b

    cat = w if mems is None else jnp.concatenate([mems, w], 0)
    inp = layer_norm(cat, params["ln1_g"], params["ln1_b"]) if pre_lnorm else cat
    w_heads = jnp.einsum("tbd,hd->tbh", inp, params["qkv_w"], precision=hp)
    w_head_q, w_head_k, w_head_v = jnp.split(w_heads, 3, axis=-1)
    w_head_q = w_head_q[-qlen:]
    klen = w_head_k.shape[0]
    w_head_q = w_head_q.reshape(qlen, bsz, n_head, d_head)
    w_head_k = w_head_k.reshape(klen, bsz, n_head, d_head)
    w_head_v = w_head_v.reshape(klen, bsz, n_head, d_head)

    r_len = r_emb.shape[0]
    if klen > r_len:
        r_emb_k = jnp.concatenate(
            [jnp.broadcast_to(r_emb[0:1], (klen - r_len, n_head, d_head)), r_emb], 0)
        r_bias_k = jnp.concatenate(
            [jnp.broadcast_to(r_bias[0:1], (klen - r_len, n_head)), r_bias], 0)
    else:
        r_emb_k = r_emb[-klen:]
        r_bias_k = r_bias[-klen:]

    rw_head_q = w_head_q + r_w_bias[None]
    AC = jnp.einsum("ibnd,jbnd->ijbn", rw_head_q, w_head_k, precision=hp)
    B_ = jnp.einsum("ibnd,jnd->ijbn", w_head_q, r_emb_k, precision=hp)
    D_ = r_bias_k[None, :, None]
    x = B_ + D_                                            # [q, k, b, n]
    zp = jnp.zeros((x.shape[0], 1) + x.shape[2:], x.dtype)
    xp = jnp.concatenate([zp, x], axis=1)
    xp = xp.reshape((x.shape[1] + 1, x.shape[0]) + x.shape[2:])
    BD = xp[1:].reshape(x.shape)

    attn_score = (AC + BD) * scale
    if attn_mask is not None:
        am = jnp.asarray(attn_mask)
        if am.ndim == 2:
            # semantically-intended broadcast of a [qlen, klen] mask over (bsz, n_head)
            attn_score = jnp.where(am[:, :, None, None] != 0, -jnp.inf, attn_score)
        elif am.ndim == 3:
            attn_score = jnp.where(am[:, :, :, None] != 0, -jnp.inf, attn_score)
    attn_prob = jax.nn.softmax(attn_score, axis=1)
    attn_vec = jnp.einsum("ijbn,jbnd->ibnd", attn_prob, w_head_v, precision=hp)
    attn_vec = attn_vec.reshape(qlen, bsz, n_head * d_head)
    attn_out = jnp.einsum("ibh,dh->ibd", attn_vec, params["o_w"], precision=hp)
    if pre_lnorm:
        out_attn = w + attn_out
    else:
        out_attn = layer_norm(w + attn_out, params["ln1_g"], params["ln1_b"])

    ff_in = layer_norm(out_attn, params["ln2_g"], params["ln2_b"]) if pre_lnorm else out_attn
    h = jax.nn.relu(jnp.einsum("ibd,fd->ibf", ff_in, params["ff1_w"], precision=hp)
                    + params["ff1_b"])
    core = jnp.einsum("ibf,df->ibd", h, params["ff2_w"], precision=hp) + params["ff2_b"]
    if pre_lnorm:
        out = out_attn + core
    else:
        out = layer_norm(out_attn + core, params["ln2_g"], params["ln2_b"])
    return out


# ----------------------------------------------------------------------------
if __name__ == "__main__":
    key = jax.random.PRNGKey(0)
    n_head, d_model, d_head, d_inner = 2, 16, 8, 32
    qlen, mem_len, bsz = 8, 4, 2
    klen = qlen + mem_len
    r_len = 16  # r_emb longer than klen -> exercises the slicing path

    ks = jax.random.split(key, 16)
    s = 0.15
    params = {
        "qkv_w": s * jax.random.normal(ks[0], (3 * n_head * d_head, d_model), jnp.float32),
        "o_w":   s * jax.random.normal(ks[1], (d_model, n_head * d_head), jnp.float32),
        "ln1_g": 1.0 + 0.05 * jax.random.normal(ks[2], (d_model,), jnp.float32),
        "ln1_b": 0.05 * jax.random.normal(ks[3], (d_model,), jnp.float32),
        "ff1_w": s * jax.random.normal(ks[4], (d_inner, d_model), jnp.float32),
        "ff1_b": 0.05 * jax.random.normal(ks[5], (d_inner,), jnp.float32),
        "ff2_w": s * jax.random.normal(ks[6], (d_model, d_inner), jnp.float32),
        "ff2_b": 0.05 * jax.random.normal(ks[7], (d_model,), jnp.float32),
        "ln2_g": 1.0 + 0.05 * jax.random.normal(ks[8], (d_model,), jnp.float32),
        "ln2_b": 0.05 * jax.random.normal(ks[9], (d_model,), jnp.float32),
    }

    dec_inp = 0.5 * jax.random.normal(ks[10], (qlen, bsz, d_model), jnp.float32)
    mems = 0.5 * jax.random.normal(ks[11], (mem_len, bsz, d_model), jnp.float32)
    r_emb = 0.1 * jax.random.normal(ks[12], (r_len, n_head, d_head), jnp.float32)
    r_w_bias = 0.1 * jax.random.normal(ks[13], (n_head, d_head), jnp.float32)
    r_bias = 0.1 * jax.random.normal(ks[14], (r_len, n_head), jnp.float32)

    # Causal decoder mask, torch-style 3-D [qlen, klen, 1]: j > i + mem_len.
    ii = jnp.arange(qlen)[:, None]
    jj = jnp.arange(klen)[None, :]
    dec_attn_mask = (jj > ii + mem_len).astype(jnp.float32)[:, :, None]

    ref = reference_forward(params, dec_inp, r_emb, r_w_bias, r_bias,
                            attn_mask=dec_attn_mask, mems=mems, pre_lnorm=False)

    # f32 compute path: tight check against the reference.
    out_f32 = rel_learnable_decoder_layer(params, dec_inp, r_emb, r_w_bias, r_bias,
                                          attn_mask=dec_attn_mask, mems=mems,
                                          pre_lnorm=False,
                                          compute_dtype=jnp.float32)
    out_f32 = jax.block_until_ready(out_f32)
    assert out_f32.shape == (qlen, bsz, d_model)
    err_f32 = float(jnp.max(jnp.abs(out_f32 - ref)))
    assert err_f32 < 2e-3, f"f32 max_err={err_f32}"

    # bf16 MXU path (performance default): looser tolerance.
    out_bf16 = rel_learnable_decoder_layer(params, dec_inp, r_emb, r_w_bias, r_bias,
                                           attn_mask=dec_attn_mask, mems=mems,
                                           pre_lnorm=False,
                                           compute_dtype=jnp.bfloat16)
    out_bf16 = jax.block_until_ready(out_bf16)
    err_bf16 = float(jnp.max(jnp.abs(out_bf16.astype(jnp.float32) - ref)))
    assert err_bf16 < 1e-1, f"bf16 max_err={err_bf16}"

    # pre_lnorm variant (f32, tight) to cover the other code path.
    ref_pre = reference_forward(params, dec_inp, r_emb, r_w_bias, r_bias,
                                attn_mask=dec_attn_mask, mems=mems, pre_lnorm=True)
    out_pre = rel_learnable_decoder_layer(params, dec_inp, r_emb, r_w_bias, r_bias,
                                          attn_mask=dec_attn_mask, mems=mems,
                                          pre_lnorm=True,
                                          compute_dtype=jnp.float32)
    out_pre = jax.block_until_ready(out_pre)
    err_pre = float(jnp.max(jnp.abs(out_pre - ref_pre)))
    assert err_pre < 2e-3, f"pre_lnorm max_err={err_pre}"

    print("KERNEL_OK")
</pallas_src>

<mosaic_0001>
module attributes {stable_mosaic.version = 11 : i64} {
  func.func @_linear_kernel(%arg0: i32, %arg1: i32, %arg2: i32, %arg3: memref<16x16xf32, #tpu.memory_space<vmem>>, %arg4: memref<16x16xf32, #tpu.memory_space<vmem>>, %arg5: memref<1x16xf32, #tpu.memory_space<vmem>>, %arg6: memref<16x16xf32, #tpu.memory_space<vmem>>, %arg7: memref<16x16xf32, #tpu.memory_space<vmem>>) attributes {dimension_semantics = [#tpu.dimension_semantics<parallel>, #tpu.dimension_semantics<parallel>, #tpu.dimension_semantics<arbitrary>], iteration_bounds = array<i64: 1, 1, 1>, scalar_prefetch = 0 : i64, scratch_operands = 1 : i64, tpu.core_type = #tpu.core_type<tc>, window_params = [{transform_indices = @transform_0, window_bounds = array<i64: 16, 16>}, {transform_indices = @transform_1, window_bounds = array<i64: 16, 16>}, {transform_indices = @transform_2, window_bounds = array<i64: 1, 16>}, {transform_indices = @transform_3, window_bounds = array<i64: 16, 16>}]} {
    %c0_i32 = arith.constant 0 : i32
    %0 = arith.cmpi eq, %arg2, %c0_i32 : i32
    %1 = arith.extui %0 : i1 to i32
    %c0_i32_0 = arith.constant 0 : i32
    %2 = arith.cmpi ne, %1, %c0_i32_0 : i32
    scf.if %2 {
      %cst_10 = arith.constant 0.000000e+00 : f32
      %12 = vector.broadcast %cst_10 : f32 to vector<16x16xf32>
      %c0_11 = arith.constant 0 : index
      %c0_12 = arith.constant 0 : index
      %13 = vector.load %arg7[%c0_11, %c0_12] : memref<16x16xf32, #tpu.memory_space<vmem>>, vector<16x16xf32>
      tpu.vector_store %arg7[%c0_11, %c0_12], %12 {strides = array<i32>} : memref<16x16xf32, #tpu.memory_space<vmem>>, vector<16x16xf32>,
    } else {
    }
    %c0 = arith.constant 0 : index
    %c0_1 = arith.constant 0 : index
    %3 = vector.load %arg7[%c0, %c0_1] : memref<16x16xf32, #tpu.memory_space<vmem>>, vector<16x16xf32>
    %c0_2 = arith.constant 0 : index
    %c0_3 = arith.constant 0 : index
    %4 = vector.load %arg3[%c0_2, %c0_3] : memref<16x16xf32, #tpu.memory_space<vmem>>, vector<16x16xf32>
    %c0_4 = arith.constant 0 : index
    %c0_5 = arith.constant 0 : index
    %5 = vector.load %arg4[%c0_4, %c0_5] : memref<16x16xf32, #tpu.memory_space<vmem>>, vector<16x16xf32>
    %cst = arith.constant dense<0.000000e+00> : vector<16x16xf32>
    %6 = tpu.matmul %4, %5, %cst {dimension_numbers = #tpu.dot_dimension_numbers<[1], [1], [0], [0], [0, 0, 1, 0], [], []>} : vector<16x16xf32>, vector<16x16xf32>, vector<16x16xf32> -> vector<16x16xf32>
    %7 = arith.addf %3, %6 : vector<16x16xf32>
    %c0_6 = arith.constant 0 : index
    %c0_7 = arith.constant 0 : index
    %8 = vector.load %arg7[%c0_6, %c0_7] : memref<16x16xf32, #tpu.memory_space<vmem>>, vector<16x16xf32>
    tpu.vector_store %arg7[%c0_6, %c0_7], %7 {strides = array<i32>} : memref<16x16xf32, #tpu.memory_space<vmem>>, vector<16x16xf32>,
    %c0_i32_8 = arith.constant 0 : i32
    %9 = arith.cmpi eq, %arg2, %c0_i32_8 : i32
    %10 = arith.extui %9 : i1 to i32
    %c0_i32_9 = arith.constant 0 : i32
    %11 = arith.cmpi ne, %10, %c0_i32_9 : i32
    scf.if %11 {
      %c0_10 = arith.constant 0 : index
      %c0_11 = arith.constant 0 : index
      %12 = vector.load %arg7[%c0_10, %c0_11] : memref<16x16xf32, #tpu.memory_space<vmem>>, vector<16x16xf32>
      %c0_12 = arith.constant 0 : index
      %c0_13 = arith.constant 0 : index
      %13 = vector.load %arg5[%c0_12, %c0_13] : memref<1x16xf32, #tpu.memory_space<vmem>>, vector<1x16xf32>
      %14 = vector.broadcast %13 : vector<1x16xf32> to vector<16x16xf32>
      %15 = arith.addf %12, %14 : vector<16x16xf32>
      %c0_14 = arith.constant 0 : index
      %c0_15 = arith.constant 0 : index
      %16 = vector.load %arg6[%c0_14, %c0_15] : memref<16x16xf32, #tpu.memory_space<vmem>>, vector<16x16xf32>
      tpu.vector_store %arg6[%c0_14, %c0_15], %15 {strides = array<i32>} : memref<16x16xf32, #tpu.memory_space<vmem>>, vector<16x16xf32>,
    } else {
    }
    return
  }
  func.func @transform_0(%arg0: i32, %arg1: i32, %arg2: i32) -> (i32, i32) {
    %c0_i32 = arith.constant 0 : i32
    return %arg0, %arg2 : i32, i32
  }
  func.func @transform_1(%arg0: i32, %arg1: i32, %arg2: i32) -> (i32, i32) {
    %c0_i32 = arith.constant 0 : i32
    return %arg1, %arg2 : i32, i32
  }
  func.func @transform_2(%arg0: i32, %arg1: i32, %arg2: i32) -> (i32, i32) {
    %c0_i32 = arith.constant 0 : i32
    %c0_i32_0 = arith.constant 0 : i32
    return %c0_i32, %arg1 : i32, i32
  }
  func.func @transform_3(%arg0: i32, %arg1: i32, %arg2: i32) -> (i32, i32) {
    %c0_i32 = arith.constant 0 : i32
    return %arg0, %arg1 : i32, i32
  }
}

</mosaic_0001>

<llo_original>
// kernel: tpu_custom_call.1
$region0: #{tpu_custom_call.1}
  #allocation0 [shape = 'u32[]', space=smem, size = 0x4, offset = 0x4, fixed_abs, tag = 'smem constant byte address 0x4 - core index']
  #allocation1 [shape = 'u32[144,128]{1,0:T(1,128)}', space=vmem, size = 0x12000, scoped, tag = 'internal scratch']
  #allocation2 [shape = 'f32[16,16]{1,0:T(8,128)}', space=vmem, size = 0x2000, scoped, tag = 'scratch operand']
  %s0 = inlined_call_operand.hbm [shape: f32[16,16], index: 0, kind: input, shape index: {}]
  %s1 = inlined_call_operand.hbm [shape: f32[16,16], index: 1, kind: input, shape index: {}]
  %s2 = inlined_call_operand.vmem [shape: f32[1,16], index: 2, kind: input, shape index: {}]
  %s3 = inlined_call_operand.hbm [shape: f32[16,16], index: 3, kind: output, shape index: {}]
  %s4 = sld [smem:[#allocation0]]
  $region38: #{tpu_custom_call.1} parent=0
    _
  %s6 = ssub.s32 1, %s4
  %s7 = scalar_select 0, %s6, %s4
  $region1: #{tpu_custom_call.1} parent=0
    #allocation3 [shape = 'u8[8192]{0}', space=vmem, size = 0x2000, scoped, tag = 'input window, operand 0, single buffered']
    #allocation4 [shape = 's32[1]{0}', space=sflag, size = 0x4, scoped, tag = 'scoped memory for tpu_custom_call.1']
    #allocation5 [shape = 's32[1]{0}', space=sflag, size = 0x4, scoped, tag = 'scoped memory for tpu_custom_call.1']
    #allocation6 [shape = 'u8[8192]{0}', space=vmem, size = 0x2000, scoped, tag = 'input window, operand 1, single buffered']
    #allocation7 [shape = 's32[1]{0}', space=sflag, size = 0x4, scoped, tag = 'scoped memory for tpu_custom_call.1']
    #allocation8 [shape = 'u8[8192]{0}', space=vmem, size = 0x2000, scoped, tag = 'output window, operand 0, single buffered']
    %8 = vsyncpa [#allocation4], 0
    %9 = vsyncpa [#allocation7], 0
    %10 = vsyncpa [#allocation5], 0
    // Predicated region
    $region2: #{tpu_custom_call.1} parent=1 // pred_check
      _
    $region3: #{tpu_custom_call.1} parent=1 // pred_check_branch
      %12 = sbr.rel (0) target = $region5
    $region4: #{tpu_custom_call.1} parent=1 // pred_region
      %s14 = ssub.s32 256, 256
      %15 = vsyncadd [#allocation4], %s14
      %s16 = sshll.u32 [#allocation3], 4
      %s17 = int_to_ptr.vmem [resolvable:$true] %s16
      %22 = dma.hbm_to_vmem [thread:$0]  %s0, 256, %s17, [#allocation4], 128, 128, 8
    $region5: #{tpu_custom_call.1} parent=1 // pred_fallthru
      _
    // Predicated region
    $region6: #{tpu_custom_call.1} parent=1 // pred_check
      _
    $region7: #{tpu_custom_call.1} parent=1 // pred_check_branch
      %24 = sbr.rel (0) target = $region9
    $region8: #{tpu_custom_call.1} parent=1 // pred_region
      %s26 = ssub.s32 256, 256
      %27 = vsyncadd [#allocation7], %s26
      %s28 = sshll.u32 [#allocation6], 4
      %s29 = int_to_ptr.vmem [resolvable:$true] %s28
      %34 = dma.hbm_to_vmem [thread:$0]  %s1, 256, %s29, [#allocation7], 128, 128, 8
    $region9: #{tpu_custom_call.1} parent=1 // pred_fallthru
      _
    // Predicated region
    $region10: #{tpu_custom_call.1} parent=1 // pred_check
      _
    $region11: #{tpu_custom_call.1} parent=1 // pred_check_branch
      %36 = sbr.rel (0) target = $region13
    $region12: #{tpu_custom_call.1} parent=1 // pred_region
      _
    $region13: #{tpu_custom_call.1} parent=1 // pred_fallthru
      _
    // Predicated region
    $region14: #{tpu_custom_call.1} parent=1 // pred_check
      _
    $region15: #{tpu_custom_call.1} parent=1 // pred_check_branch
      %38 = sbr.rel (0) target = $region17
    $region16: #{tpu_custom_call.1} parent=1 // pred_region
      %39 = dma.done [#allocation4], 256
    $region17: #{tpu_custom_call.1} parent=1 // pred_fallthru
      _
    // Predicated region
    $region18: #{tpu_custom_call.1} parent=1 // pred_check
      _
    $region19: #{tpu_custom_call.1} parent=1 // pred_check_branch
      %41 = sbr.rel (0) target = $region21
    $region20: #{tpu_custom_call.1} parent=1 // pred_region
      %42 = dma.done [#allocation7], 256
    $region21: #{tpu_custom_call.1} parent=1 // pred_fallthru
      _
    %p43 = scmp.eq.s32.totalorder 0, 0
    // Predicated region
    $region22: #{tpu_custom_call.1} parent=1 // pred_check
      %p44 = pneg %p43
    $region23: #{tpu_custom_call.1} parent=1 // pred_check_branch
      %46 = sbr.rel (%p44) target = $region25
    $region24: #{tpu_custom_call.1} parent=1 // pred_region
      %vm47 = vcmask 130048
      %48 = vst.msk [vmem:[#allocation2] sm:$0xff] %vm47, 0.0
      %49 = vst.msk [vmem:[#allocation2 + $0x8] sm:$0xff] %vm47, 0.0
    $region25: #{tpu_custom_call.1} parent=1 // pred_fallthru
      _
    %v50 = vld [vmem:[#allocation2] sm:$0xff]
    %v51 = vld [vmem:[#allocation2 + $0x8] sm:$0xff]
    %v52 = vld [vmem:[#allocation3] sm:$0xff]
    %v53 = vld [vmem:[#allocation3 + $0x8] sm:$0xff]
    %v54 = vld [vmem:[#allocation6] sm:$0xff]
    %v55 = vld [vmem:[#allocation6 + $0x8] sm:$0xff]
    %vm56 = vcmask 130048
    %v58 = vsel %vm56, %v52, 0
    %v61 = vsel %vm56, %v53, 0
    %v64 = vsel %vm56, %v54, 0
    %v67 = vsel %vm56, %v55, 0
    %69 = vmatprep.subr.mxu0 0.0
    %70 = vmatpush1.xpose.msra.mxu0 %v64
    %71 = vmatprep.subr.mxu0 0.0
    %72 = vmatpush1.xpose.msra.mxu0 %v67
    %73 = vmatprep.subr.mxu0 0.0
    %74 = vmatpush1.xpose.msra.mxu0 0.0
    %75 = vmatprep.subr.mxu0 0.0
    %76 = vmatpush1.xpose.msra.mxu0 0.0
    %77 = vmatprep.subr.mxu0 0.0
    %78 = vmatpush1.xpose.msra.mxu0 0.0
    %79 = vmatprep.subr.mxu0 0.0
    %80 = vmatpush1.xpose.msra.mxu0 0.0
    %81 = vmatprep.subr.mxu0 0.0
    %82 = vmatpush1.xpose.msra.mxu0 0.0
    %83 = vmatprep.subr.mxu0 0.0
    %84 = vmatpush1.xpose.msra.mxu0 0.0
    %85 = vmatprep.subr.mxu0 0.0
    %86 = vmatpush1.xpose.msra.mxu0 0.0
    %87 = vmatprep.subr.mxu0 0.0
    %88 = vmatpush1.xpose.msra.mxu0 0.0
    %89 = vmatprep.subr.mxu0 0.0
    %90 = vmatpush1.xpose.msra.mxu0 0.0
    %91 = vmatprep.subr.mxu0 0.0
    %92 = vmatpush1.xpose.msra.mxu0 0.0
    %93 = vmatprep.subr.mxu0 0.0
    %94 = vmatpush1.xpose.msra.mxu0 0.0
    %95 = vmatprep.subr.mxu0 0.0
    %96 = vmatpush1.xpose.msra.mxu0 0.0
    %97 = vmatprep.subr.mxu0 0.0
    %98 = vmatpush1.xpose.msra.mxu0 0.0
    %99 = vmatprep.subr.mxu0 0.0
    %100 = vmatpush1.xpose.msra.mxu0 0.0
    %101 = vmatprep.subr.mxu0 0.0
    %102 = vmatpush1.xpose.msra.mxu0 0.0
    %103 = vmatprep.subr.mxu0 0.0
    %104 = vmatpush1.xpose.msra.mxu0 0.0
    %105 = vmatprep.subr.mxu0 0.0
    %106 = vmatpush1.xpose.msra.mxu0 0.0
    %107 = vmatprep.subr.mxu0 0.0
    %108 = vmatpush1.xpose.msra.mxu0 0.0
    %109 = vmatprep.subr.mxu0 0.0
    %110 = vmatpush1.xpose.msra.mxu0 0.0
    %111 = vmatprep.subr.mxu0 0.0
    %112 = vmatpush1.xpose.msra.mxu0 0.0
    %113 = vmatprep.subr.mxu0 0.0
    %114 = vmatpush1.xpose.msra.mxu0 0.0
    %115 = vmatprep.subr.mxu0 0.0
    %116 = vmatpush1.xpose.msra.mxu0 0.0
    %117 = vmatprep.subr.mxu0 0.0
    %118 = vmatpush1.xpose.msra.mxu0 0.0
    %119 = vmatprep.subr.mxu0 0.0
    %120 = vmatpush1.xpose.msra.mxu0 0.0
    %121 = vmatprep.subr.mxu0 0.0
    %122 = vmatpush1.xpose.msra.mxu0 0.0
    %123 = vmatprep.subr.mxu0 0.0
    %124 = vmatpush1.xpose.msra.mxu0 0.0
    %125 = vmatprep.subr.mxu0 0.0
    %126 = vmatpush1.xpose.msra.mxu0 0.0
    %127 = vmatprep.subr.mxu0 0.0
    %128 = vmatpush1.xpose.msra.mxu0 0.0
    %129 = vmatprep.subr.mxu0 0.0
    %130 = vmatpush1.xpose.msra.mxu0 0.0
    %131 = vmatprep.subr.mxu0 0.0
    %132 = vmatpush1.xpose.msra.mxu0 0.0
    %133 = vmatprep.mubr.f32.mxu0 0.0
    %134 = vmatmul.mubr.f32.gmra.mrb[0].mxu0 %v58
    %v135 = vpop.f32.mrb[0].mxu0
    %v136 = vadd.f32 0.0, %v135
    %v137 = vpop.f32.mrb[0].mxu0
    %138 = vmatprep.mubr.f32.mxu0 0.0
    %139 = vmatmul.mubr.f32.gmra.mrb[0].mxu0 %v61
    %v140 = vpop.f32.mrb[0].mxu0
    %v141 = vadd.f32 0.0, %v140
    %v142 = vpop.f32.mrb[0].mxu0
    %143 = vdwg.mxu0
    %v144 = vadd.f32 %v50, %v136
    %v145 = vadd.f32 %v51, %v141
    %146 = vst.msk [vmem:[#allocation2] sm:$0xff] %vm56, %v144
    %147 = vst.msk [vmem:[#allocation2 + $0x8] sm:$0xff] %vm56, %v145
    // Predicated region
    $region26: #{tpu_custom_call.1} parent=1 // pred_check
      %p148 = pneg %p43
    $region27: #{tpu_custom_call.1} parent=1 // pred_check_branch
      %150 = sbr.rel (%p148) target = $region29
    $region28: #{tpu_custom_call.1} parent=1 // pred_region
      %v151 = vld [vmem:[#allocation2] sm:$0xff]
      %v152 = vld [vmem:[#allocation2 + $0x8] sm:$0xff]
      %v153 = vld [vmem:[%s2] sm:$0x1]
      %v155 = vlaneseq
      %v156 = vshrl.u32 %v155, 7
      %v157 = vsub.s32 0, %v156
      %v158 = vrot.slane %v153, %v157
      %v160 = vadd.f32 %v151, %v158
      %v161 = vadd.f32 %v152, %v158
      %162 = vst.msk [vmem:[#allocation8] sm:$0xff] %vm56, %v160
      %163 = vst.msk [vmem:[#allocation8 + $0x8] sm:$0xff] %vm56, %v161
    $region29: #{tpu_custom_call.1} parent=1 // pred_fallthru
      _
    // Predicated region
    $region30: #{tpu_custom_call.1} parent=1 // pred_check
      _
    $region31: #{tpu_custom_call.1} parent=1 // pred_check_branch
      %165 = sbr.rel (0) target = $region33
    $region32: #{tpu_custom_call.1} parent=1 // pred_region
      %s167 = ssub.s32 256, 256
      %168 = vsyncadd [#allocation5], %s167
      %s169 = sshll.u32 [#allocation8], 4
      %s170 = int_to_ptr.vmem [resolvable:$true] %s169
      %175 = dma.vmem_to_hbm [thread:$0]  %s170, 256, %s3, [#allocation5], 128, 128, 8
    $region33: #{tpu_custom_call.1} parent=1 // pred_fallthru
      _
    // Predicated region
    $region34: #{tpu_custom_call.1} parent=1 // pred_check
      _
    $region35: #{tpu_custom_call.1} parent=1 // pred_check_branch
      %177 = sbr.rel (0) target = $region37
    $region36: #{tpu_custom_call.1} parent=1 // pred_region
      %178 = dma.done [#allocation5], 256
    $region37: #{tpu_custom_call.1} parent=1 // pred_fallthru
      _
    %179 = vsyncpa [#allocation4], 1
    %180 = vsyncpa [#allocation7], 1
    %181 = vsyncpa [#allocation5], 1

</llo_original>
